<compile_context>
chip_gen: v5e
topology: v5e:2x2
jax: 0.10.0
libtpu: 0.0.40
codegen_flags: <defaults>
</compile_context>

<pallas_src>
import functools

import jax
import jax.numpy as jnp
from jax.experimental import pallas as pl
from jax.experimental.pallas import tpu as pltpu

BN_EPS = 1e-5
NEG_INF = -1e9
VMEM_LIMIT_BYTES = 32 * 1024 * 1024  # raises v5e's 16 MiB default; no-op on v6e/v7x


def _round_up(x, m):
    return ((x + m - 1) // m) * m


def _attn_tiles(n):
    """Padded node count and (TM, TK) attention tiles.

    TM=256 / TK=512 keeps the double-buffered wh/adj tiles plus the f32 accumulator
    well under v7x's 64 MiB physical VMEM (and trivially under v5e/v6e's 128 MiB).
    """
    n_pad = _round_up(max(n, 8), 128)
    if n_pad >= 512:
        tm, tk = 256, 512
        n_pad = _round_up(n_pad, tk)
    else:
        tm = tk = n_pad
    return n_pad, tm, tk


# ---------------------------------------------------------------------------
# Kernel A1: fused node transform
#   h_in = h + vn[batch]        (one-hot gather via MXU)
#   wh   = h_in @ W_fold + bias_fold       (BN folded; bias folded through softmax)
#   s    = h_in @ [W a_dst^T | W a_src^T]  (attention-logit projections, [TM, 2])
# ---------------------------------------------------------------------------
def node_transform_kernel(h_ref, at_ref, vn_ref, w_ref, b_ref, wa_ref,
                          wh_ref, s_ref):
    h_in = h_ref[...] + jnp.dot(at_ref[...], vn_ref[...],
                                preferred_element_type=jnp.float32)
    wh = jnp.dot(h_in.astype(jnp.bfloat16), w_ref[...],
                 preferred_element_type=jnp.float32) + b_ref[...]
    wh_ref[...] = wh.astype(wh_ref.dtype)
    s_ref[...] = jnp.dot(h_in, wa_ref[...], preferred_element_type=jnp.float32)


def _node_transform(h, assign_t, vn, w_bf16, bias, wa, *, tm):
    n_pad, d_pad = h.shape
    gp = vn.shape[0]
    wh, s = pl.pallas_call(
        node_transform_kernel,
        grid=(n_pad // tm,),
        in_specs=[
            pl.BlockSpec((tm, d_pad), lambda i: (i, 0)),     # h tile
            pl.BlockSpec((tm, gp), lambda i: (i, 0)),        # node->graph one-hot
            pl.BlockSpec((gp, d_pad), lambda i: (0, 0)),     # vn
            pl.BlockSpec((d_pad, d_pad), lambda i: (0, 0)),  # W_fold (bf16)
            pl.BlockSpec((1, d_pad), lambda i: (0, 0)),      # bias_fold
            pl.BlockSpec((d_pad, 2), lambda i: (0, 0)),      # [W a_dst^T | W a_src^T]
        ],
        out_specs=[
            pl.BlockSpec((tm, d_pad), lambda i: (i, 0)),
            pl.BlockSpec((tm, 2), lambda i: (i, 0)),
        ],
        out_shape=[
            jax.ShapeDtypeStruct((n_pad, d_pad), jnp.bfloat16),
            jax.ShapeDtypeStruct((n_pad, 2), jnp.float32),
        ],
        compiler_params=pltpu.CompilerParams(
            dimension_semantics=("parallel",),
            vmem_limit_bytes=VMEM_LIMIT_BYTES),
    )(h, assign_t, vn, w_bf16, bias, wa)
    return wh, s


# ---------------------------------------------------------------------------
# Kernel A2: flash-style GAT attention over the dense (int8) adjacency mask
#   e[i, j] = LeakyReLU(a_dst.Wh_i + a_src.Wh_j); softmax over masked j;
#   out_i   = sum_j alpha_ij * wh_j   (BN + bias already folded into wh)
# Tiles whose adjacency block is all-zero skip the whole update (scalar-prefetch
# flags, pl.when); only the diagonal / intra-graph tiles do real work.
# ---------------------------------------------------------------------------
def gat_attention_kernel(flags_ref, s_dst_ref, s_src_ref, wh_ref, adj_ref,
                         out_ref, m_sc, l_sc, acc_sc, *, apply_relu):
    i = pl.program_id(0)
    k = pl.program_id(1)
    nk = pl.num_programs(1)

    @pl.when(k == 0)
    def _():
        m_sc[...] = jnp.full_like(m_sc, NEG_INF)
        l_sc[...] = jnp.zeros_like(l_sc)
        acc_sc[...] = jnp.zeros_like(acc_sc)

    @pl.when(flags_ref[i * nk + k] > 0)      # skip all-zero adjacency tiles
    def _():
        s_dst = s_dst_ref[...][:, 0:1]                      # [TM, 1]
        s_src = s_src_ref[...][:, 1:2]                      # [TK, 1]
        e = s_dst + jnp.transpose(s_src)                    # [TM, TK]
        e = jnp.where(e > 0, e, 0.2 * e)                    # LeakyReLU(0.2)

        adj_f = adj_ref[...].astype(jnp.float32)            # {0, 1} mask
        m_prev = m_sc[...]
        # Unmasked max keeps m_new >= e everywhere -> exp never overflows (NaN-safe).
        m_new = jnp.maximum(m_prev, jnp.max(e, axis=-1, keepdims=True))
        p = jnp.exp(e - m_new) * adj_f                      # masked, unnormalized probs
        corr = jnp.exp(m_prev - m_new)
        l_sc[...] = corr * l_sc[...] + jnp.sum(p, axis=-1, keepdims=True)
        acc_sc[...] = corr * acc_sc[...] + jnp.dot(
            p.astype(jnp.bfloat16), wh_ref[...],
            preferred_element_type=jnp.float32)
        m_sc[...] = m_new

    @pl.when(k == nk - 1)
    def _():
        inv_l = pl.reciprocal(jnp.maximum(l_sc[...], 1e-30), approx=True)
        out = acc_sc[...] * inv_l
        if apply_relu:
            out = jnp.maximum(out, 0.0)
        out_ref[...] = out.astype(out_ref.dtype)


def _gat_attention(tile_flags, s, wh, adj, *, tm, tk, apply_relu):
    n_pad, d_pad = wh.shape
    ni, nk = n_pad // tm, n_pad // tk
    grid_spec = pltpu.PrefetchScalarGridSpec(
        num_scalar_prefetch=1,
        grid=(ni, nk),
        in_specs=[
            pl.BlockSpec((tm, 2), lambda i, k, flags: (i, 0)),      # s (target rows)
            pl.BlockSpec((tk, 2), lambda i, k, flags: (k, 0)),      # s (source rows)
            pl.BlockSpec((tk, d_pad), lambda i, k, flags: (k, 0)),  # wh (src rows, bf16)
            pl.BlockSpec((tm, tk), lambda i, k, flags: (i, k)),     # adjacency (int8)
        ],
        out_specs=pl.BlockSpec((tm, d_pad), lambda i, k, flags: (i, 0)),
        scratch_shapes=[
            pltpu.VMEM((tm, 1), jnp.float32),      # running max
            pltpu.VMEM((tm, 1), jnp.float32),      # running denom
            pltpu.VMEM((tm, d_pad), jnp.float32),  # accumulator
        ],
    )
    return pl.pallas_call(
        functools.partial(gat_attention_kernel, apply_relu=apply_relu),
        grid_spec=grid_spec,
        out_shape=jax.ShapeDtypeStruct((n_pad, d_pad), jnp.float32),
        compiler_params=pltpu.CompilerParams(
            dimension_semantics=("parallel", "arbitrary"),
            vmem_limit_bytes=VMEM_LIMIT_BYTES),
    )(tile_flags, s, s, wh, adj)


# ---------------------------------------------------------------------------
# Kernel B: virtual-node update (tiled add-pool reduction over nodes + 2-layer MLP)
#   pooled(h_in) + vn = assign @ h + (counts + 1) * vn
#   vn <- ReLU((ReLU(tmp @ W1f + b1f)) @ W2f + b2f)     (BN folded)
# ---------------------------------------------------------------------------
def vn_update_kernel(assign_ref, h_ref, vn_ref, c1_ref,
                     w1_ref, b1_ref, w2_ref, b2_ref, out_ref, acc_sc):
    k = pl.program_id(0)

    @pl.when(k == 0)
    def _():
        acc_sc[...] = jnp.zeros_like(acc_sc)

    acc_sc[...] += jnp.dot(assign_ref[...], h_ref[...],
                           preferred_element_type=jnp.float32)

    @pl.when(k == pl.num_programs(0) - 1)
    def _():
        tmp = acc_sc[...] + c1_ref[...] * vn_ref[...]
        z = jnp.dot(tmp.astype(jnp.bfloat16), w1_ref[...],
                    preferred_element_type=jnp.float32) + b1_ref[...]
        z = jnp.maximum(z, 0.0)
        z = jnp.dot(z.astype(jnp.bfloat16), w2_ref[...],
                    preferred_element_type=jnp.float32) + b2_ref[...]
        out_ref[...] = jnp.maximum(z, 0.0)


def _vn_update(assign, h, vn, c1, w1, b1, w2, b2, *, tk):
    gp, n_pad = assign.shape
    d_pad = h.shape[1]
    hid_pad = w1.shape[1]
    return pl.pallas_call(
        vn_update_kernel,
        grid=(n_pad // tk,),
        in_specs=[
            pl.BlockSpec((gp, tk), lambda k: (0, k)),
            pl.BlockSpec((tk, d_pad), lambda k: (k, 0)),
            pl.BlockSpec((gp, d_pad), lambda k: (0, 0)),
            pl.BlockSpec((gp, 1), lambda k: (0, 0)),
            pl.BlockSpec((d_pad, hid_pad), lambda k: (0, 0)),
            pl.BlockSpec((1, hid_pad), lambda k: (0, 0)),
            pl.BlockSpec((hid_pad, d_pad), lambda k: (0, 0)),
            pl.BlockSpec((1, d_pad), lambda k: (0, 0)),
        ],
        out_specs=pl.BlockSpec((gp, d_pad), lambda k: (0, 0)),
        out_shape=jax.ShapeDtypeStruct((gp, d_pad), jnp.float32),
        scratch_shapes=[pltpu.VMEM((gp, d_pad), jnp.float32)],
        compiler_params=pltpu.CompilerParams(
            dimension_semantics=("arbitrary",),
            vmem_limit_bytes=VMEM_LIMIT_BYTES),
    )(assign, h, vn, c1, w1, b1, w2, b2)


# ---------------------------------------------------------------------------
# Kernel C: global mean pool (tiled reduction over nodes; counts precomputed)
# ---------------------------------------------------------------------------
def mean_pool_kernel(assign_ref, h_ref, invc_ref, out_ref, acc_sc):
    k = pl.program_id(0)

    @pl.when(k == 0)
    def _():
        acc_sc[...] = jnp.zeros_like(acc_sc)

    acc_sc[...] += jnp.dot(assign_ref[...], h_ref[...],
                           preferred_element_type=jnp.float32)

    @pl.when(k == pl.num_programs(0) - 1)
    def _():
        out_ref[...] = acc_sc[...] * invc_ref[...]


def _mean_pool(assign, h, inv_counts, *, tk):
    gp, n_pad = assign.shape
    d_pad = h.shape[1]
    return pl.pallas_call(
        mean_pool_kernel,
        grid=(n_pad // tk,),
        in_specs=[
            pl.BlockSpec((gp, tk), lambda k: (0, k)),
            pl.BlockSpec((tk, d_pad), lambda k: (k, 0)),
            pl.BlockSpec((gp, 1), lambda k: (0, 0)),
        ],
        out_specs=pl.BlockSpec((gp, d_pad), lambda k: (0, 0)),
        out_shape=jax.ShapeDtypeStruct((gp, d_pad), jnp.float32),
        scratch_shapes=[pltpu.VMEM((gp, d_pad), jnp.float32)],
        compiler_params=pltpu.CompilerParams(
            dimension_semantics=("arbitrary",),
            vmem_limit_bytes=VMEM_LIMIT_BYTES),
    )(assign, h, inv_counts)


# ---------------------------------------------------------------------------
# Parameter init (deterministic, matches the PyTorch module's parameterization)
# ---------------------------------------------------------------------------
def init_gnn_params(key, num_layer, emb_dim):
    D = emb_dim
    kit = iter(jax.random.split(key, 128))

    def nrm(shape, scale=1.0):
        return (scale * jax.random.normal(next(kit), shape)).astype(jnp.float32)

    gat_layers = []
    for _ in range(num_layer):
        gat_layers.append(dict(
            w=nrm((D, D), 1.0 / D ** 0.5),
            a_src=nrm((1, D), 1.0 / D ** 0.5),
            a_dst=nrm((1, D), 1.0 / D ** 0.5),
            bias=jnp.zeros((1, D), jnp.float32),
            bn_gamma=jnp.ones((1, D), jnp.float32) + 0.1 * nrm((1, D)),
            bn_beta=0.1 * nrm((1, D)),
            bn_mean=0.1 * nrm((1, D)),
            bn_var=jnp.ones((1, D), jnp.float32) + 0.1 * jnp.abs(nrm((1, D))),
        ))

    vn_layers = []
    for _ in range(num_layer - 1):
        vn_layers.append(dict(
            w1=nrm((D, 2 * D), 1.0 / D ** 0.5),
            b1=jnp.zeros((1, 2 * D), jnp.float32),
            g1=jnp.ones((1, 2 * D), jnp.float32),
            be1=jnp.zeros((1, 2 * D), jnp.float32),
            rm1=jnp.zeros((1, 2 * D), jnp.float32),
            rv1=jnp.ones((1, 2 * D), jnp.float32),
            w2=nrm((2 * D, D), 1.0 / (2 * D) ** 0.5),
            b2=jnp.zeros((1, D), jnp.float32),
            g2=jnp.ones((1, D), jnp.float32),
            be2=jnp.zeros((1, D), jnp.float32),
            rm2=jnp.zeros((1, D), jnp.float32),
            rv2=jnp.ones((1, D), jnp.float32),
        ))
    return dict(gat=gat_layers, vn=vn_layers)


# ---------------------------------------------------------------------------
# BN folding + zero padding of parameters (done once in the wrapper, exact)
# ---------------------------------------------------------------------------
def _fold_bn(w, b, gamma, beta, rm, rv):
    scale = gamma * jax.lax.rsqrt(rv + BN_EPS)         # [1, D_out]
    return w * scale, (b - rm) * scale + beta


def _pad2(a, rows, cols):
    return jnp.pad(a, ((0, rows - a.shape[0]), (0, cols - a.shape[1])))


def _prepare_params(params, d_pad, hid_pad):
    prepared = {'gat': [], 'vn': []}
    for lp in params['gat']:
        w_f, b_f = _fold_bn(lp['w'], lp['bias'], lp['bn_gamma'], lp['bn_beta'],
                            lp['bn_mean'], lp['bn_var'])
        wa = jnp.concatenate([lp['w'] @ lp['a_dst'].T,      # col 0: a_dst projection
                              lp['w'] @ lp['a_src'].T],     # col 1: a_src projection
                             axis=1)
        prepared['gat'].append(dict(
            w=_pad2(w_f, d_pad, d_pad).astype(jnp.bfloat16),
            b=_pad2(b_f, 1, d_pad),
            wa=_pad2(wa, d_pad, 2),
        ))
    for vp in params['vn']:
        w1_f, b1_f = _fold_bn(vp['w1'], vp['b1'], vp['g1'], vp['be1'],
                              vp['rm1'], vp['rv1'])
        w2_f, b2_f = _fold_bn(vp['w2'], vp['b2'], vp['g2'], vp['be2'],
                              vp['rm2'], vp['rv2'])
        prepared['vn'].append(dict(
            w1=_pad2(w1_f, d_pad, hid_pad).astype(jnp.bfloat16),
            b1=_pad2(b1_f, 1, hid_pad),
            w2=_pad2(w2_f, hid_pad, d_pad).astype(jnp.bfloat16),
            b2=_pad2(b2_f, 1, d_pad),
        ))
    return prepared


# ---------------------------------------------------------------------------
# Forward pass
# ---------------------------------------------------------------------------
def gnn_forward(params, x, edge_index, edge_attr, batch, num_graphs,
                *, num_layer, emb_dim):
    del edge_attr  # with_edge_attr=False -> edge_attr unused
    n = x.shape[0]
    d_pad = _round_up(emb_dim, 128)
    hid_pad = _round_up(2 * emb_dim, 128)
    gp = _round_up(max(num_graphs, 1), 8)
    n_pad, tm, tk = _attn_tiles(n)

    prepared = _prepare_params(params, d_pad, hid_pad)

    # Padded node features.
    h = jnp.zeros((n_pad, d_pad), jnp.float32).at[:n, :emb_dim].set(
        x.astype(jnp.float32))

    # Dense int8 adjacency with self loops: adj[target, source] = 1 (PyG GATConv).
    # NOTE: duplicate edges collapse to a single 1 (binary-mask GAT semantics).
    src, dst = edge_index[0], edge_index[1]
    adj = jnp.zeros((n_pad, n_pad), jnp.int8).at[dst, src].set(1)
    adj = jnp.maximum(adj, jnp.eye(n_pad, dtype=jnp.int8))

    # Per-attention-tile occupancy flags (scalar-prefetched; zero tiles are skipped).
    ni, nk = n_pad // tm, n_pad // tk
    tile_flags = (adj.reshape(ni, tm, nk, tk).max(axis=(1, 3)) > 0
                  ).astype(jnp.int32).reshape(-1)

    # Graph-assignment one-hot matrices; padded nodes are assigned to no graph.
    batch_pad = jnp.full((n_pad,), gp, dtype=jnp.int32).at[:n].set(
        batch.astype(jnp.int32))
    assign = (batch_pad[None, :] ==
              jnp.arange(gp, dtype=jnp.int32)[:, None]).astype(jnp.float32)
    assign_t = assign.T                                  # [n_pad, gp]
    counts = jnp.sum(assign, axis=1, keepdims=True)      # [gp, 1]
    c1 = counts + 1.0                                    # pooled(h_in)+vn coefficient
    inv_counts = 1.0 / jnp.maximum(counts, 1.0)          # zero-count guarded

    # virtualnode_embedding = nn.Embedding(1, D) initialized to zeros (OGB).
    vn = jnp.zeros((gp, d_pad), jnp.float32)

    for layer in range(num_layer):
        lp = prepared['gat'][layer]
        wh, s = _node_transform(h, assign_t, vn, lp['w'], lp['b'], lp['wa'], tm=tm)
        apply_relu = layer < num_layer - 1               # no ReLU on last layer
        h_next = _gat_attention(tile_flags, s, wh, adj, tm=tm, tk=tk,
                                apply_relu=apply_relu)
        # dropout(p=0.5) is identity in eval mode (deterministic)

        if layer < num_layer - 1:                        # virtual-node update
            vp = prepared['vn'][layer]
            vn = _vn_update(assign, h, vn, c1,
                            vp['w1'], vp['b1'], vp['w2'], vp['b2'], tk=tk)
        h = h_next

    # JK='last' -> use final h ; graph_pooling='mean'
    h_graph = _mean_pool(assign, h, inv_counts, tk=tk)
    return h_graph[:num_graphs, :emb_dim]


if __name__ == "__main__":
    num_layer = 3          # module requires >= 2
    emb_dim = 128          # small, lane-aligned stand-in for the default 300
    G, nodes_per_graph = 2, 8
    N = G * nodes_per_graph

    key = jax.random.PRNGKey(0)
    k_params, k_x = jax.random.split(key)
    params = init_gnn_params(k_params, num_layer, emb_dim)

    x = jax.random.normal(k_x, (N, emb_dim), dtype=jnp.float32)

    # Bidirectional ring within each graph
    edges = []
    for g in range(G):
        base = g * nodes_per_graph
        for i in range(nodes_per_graph):
            s = base + i
            d = base + (i + 1) % nodes_per_graph
            edges.append((s, d))
            edges.append((d, s))
    edge_index = jnp.asarray(edges, dtype=jnp.int32).T          # [2, E]
    edge_attr = None                                            # with_edge_attr=False
    batch = jnp.repeat(jnp.arange(G, dtype=jnp.int32), nodes_per_graph)  # [N]

    out = gnn_forward(params, x, edge_index, edge_attr, batch, G,
                      num_layer=num_layer, emb_dim=emb_dim)
    out = jax.block_until_ready(out)
    assert out.shape == (G, emb_dim) and out.dtype == jnp.float32
    assert bool(jnp.all(jnp.isfinite(out)))
    print("KERNEL_OK")
</pallas_src>

<mosaic_0001>
module attributes {stable_mosaic.version = 11 : i64} {
  func.func @node_transform_kernel(%arg0: i32, %arg1: memref<128x128xf32, #tpu.memory_space<vmem>>, %arg2: memref<128x8xf32, #tpu.memory_space<vmem>>, %arg3: memref<8x128xf32, #tpu.memory_space<vmem>>, %arg4: memref<128x128xbf16, #tpu.memory_space<vmem>>, %arg5: memref<1x128xf32, #tpu.memory_space<vmem>>, %arg6: memref<128x2xf32, #tpu.memory_space<vmem>>, %arg7: memref<128x128xbf16, #tpu.memory_space<vmem>>, %arg8: memref<128x2xf32, #tpu.memory_space<vmem>>) attributes {dimension_semantics = [#tpu.dimension_semantics<parallel>], iteration_bounds = array<i64: 1>, scalar_prefetch = 0 : i64, scratch_operands = 0 : i64, tpu.core_type = #tpu.core_type<tc>, window_params = [{transform_indices = @transform_0, window_bounds = array<i64: 128, 128>}, {transform_indices = @transform_1, window_bounds = array<i64: 128, 8>}, {pipeline_mode = #tpu.pipeline_mode<synchronous>, transform_indices = @transform_2, window_bounds = array<i64: 8, 128>}, {pipeline_mode = #tpu.pipeline_mode<synchronous>, transform_indices = @transform_3, window_bounds = array<i64: 128, 128>}, {pipeline_mode = #tpu.pipeline_mode<synchronous>, transform_indices = @transform_4, window_bounds = array<i64: 1, 128>}, {pipeline_mode = #tpu.pipeline_mode<synchronous>, transform_indices = @transform_5, window_bounds = array<i64: 128, 2>}, {transform_indices = @transform_6, window_bounds = array<i64: 128, 128>}, {transform_indices = @transform_7, window_bounds = array<i64: 128, 2>}]} {
    %c0 = arith.constant 0 : index
    %c0_0 = arith.constant 0 : index
    %0 = vector.load %arg1[%c0, %c0_0] : memref<128x128xf32, #tpu.memory_space<vmem>>, vector<128x128xf32>
    %c0_1 = arith.constant 0 : index
    %c0_2 = arith.constant 0 : index
    %1 = vector.load %arg2[%c0_1, %c0_2] : memref<128x8xf32, #tpu.memory_space<vmem>>, vector<128x8xf32>
    %c0_3 = arith.constant 0 : index
    %c0_4 = arith.constant 0 : index
    %2 = vector.load %arg3[%c0_3, %c0_4] : memref<8x128xf32, #tpu.memory_space<vmem>>, vector<8x128xf32>
    %cst = arith.constant dense<0.000000e+00> : vector<128x128xf32>
    %3 = tpu.matmul %1, %2, %cst {dimension_numbers = #tpu.dot_dimension_numbers<[1], [0], [0], [1], [0, 0, 1, 1], [], []>} : vector<128x8xf32>, vector<8x128xf32>, vector<128x128xf32> -> vector<128x128xf32>
    %4 = arith.addf %0, %3 : vector<128x128xf32>
    %5 = arith.truncf %4 : vector<128x128xf32> to vector<128x128xbf16>
    %c0_5 = arith.constant 0 : index
    %c0_6 = arith.constant 0 : index
    %6 = vector.load %arg4[%c0_5, %c0_6] : memref<128x128xbf16, #tpu.memory_space<vmem>>, vector<128x128xbf16>
    %cst_7 = arith.constant dense<0.000000e+00> : vector<128x128xf32>
    %7 = tpu.matmul %5, %6, %cst_7 {dimension_numbers = #tpu.dot_dimension_numbers<[1], [0], [0], [1], [0, 0, 1, 1], [], []>} : vector<128x128xbf16>, vector<128x128xbf16>, vector<128x128xf32> -> vector<128x128xf32>
    %c0_8 = arith.constant 0 : index
    %c0_9 = arith.constant 0 : index
    %8 = vector.load %arg5[%c0_8, %c0_9] : memref<1x128xf32, #tpu.memory_space<vmem>>, vector<1x128xf32>
    %9 = vector.broadcast %8 : vector<1x128xf32> to vector<128x128xf32>
    %10 = arith.addf %7, %9 : vector<128x128xf32>
    %11 = arith.truncf %10 : vector<128x128xf32> to vector<128x128xbf16>
    %c0_10 = arith.constant 0 : index
    %c0_11 = arith.constant 0 : index
    %12 = vector.load %arg7[%c0_10, %c0_11] : memref<128x128xbf16, #tpu.memory_space<vmem>>, vector<128x128xbf16>
    tpu.vector_store %arg7[%c0_10, %c0_11], %11 {strides = array<i32>} : memref<128x128xbf16, #tpu.memory_space<vmem>>, vector<128x128xbf16>,
    %c0_12 = arith.constant 0 : index
    %c0_13 = arith.constant 0 : index
    %13 = vector.load %arg6[%c0_12, %c0_13] : memref<128x2xf32, #tpu.memory_space<vmem>>, vector<128x2xf32>
    %cst_14 = arith.constant dense<0.000000e+00> : vector<128x2xf32>
    %14 = tpu.matmul %4, %13, %cst_14 {dimension_numbers = #tpu.dot_dimension_numbers<[1], [0], [0], [1], [0, 0, 1, 1], [], []>} : vector<128x128xf32>, vector<128x2xf32>, vector<128x2xf32> -> vector<128x2xf32>
    %c0_15 = arith.constant 0 : index
    %c0_16 = arith.constant 0 : index
    %15 = vector.load %arg8[%c0_15, %c0_16] : memref<128x2xf32, #tpu.memory_space<vmem>>, vector<128x2xf32>
    tpu.vector_store %arg8[%c0_15, %c0_16], %14 {strides = array<i32>} : memref<128x2xf32, #tpu.memory_space<vmem>>, vector<128x2xf32>,
    return
  }
  func.func @transform_0(%arg0: i32) -> (i32, i32) {
    %c0_i32 = arith.constant 0 : i32
    %c0_i32_0 = arith.constant 0 : i32
    return %arg0, %c0_i32 : i32, i32
  }
  func.func @transform_1(%arg0: i32) -> (i32, i32) {
    %c0_i32 = arith.constant 0 : i32
    %c0_i32_0 = arith.constant 0 : i32
    return %arg0, %c0_i32 : i32, i32
  }
  func.func @transform_2(%arg0: i32) -> (i32, i32) {
    %c0_i32 = arith.constant 0 : i32
    %c0_i32_0 = arith.constant 0 : i32
    %c0_i32_1 = arith.constant 0 : i32
    return %c0_i32, %c0_i32_0 : i32, i32
  }
  func.func @transform_3(%arg0: i32) -> (i32, i32) {
    %c0_i32 = arith.constant 0 : i32
    %c0_i32_0 = arith.constant 0 : i32
    %c0_i32_1 = arith.constant 0 : i32
    return %c0_i32, %c0_i32_0 : i32, i32
  }
  func.func @transform_4(%arg0: i32) -> (i32, i32) {
    %c0_i32 = arith.constant 0 : i32
    %c0_i32_0 = arith.constant 0 : i32
    %c0_i32_1 = arith.constant 0 : i32
    return %c0_i32, %c0_i32_0 : i32, i32
  }
  func.func @transform_5(%arg0: i32) -> (i32, i32) {
    %c0_i32 = arith.constant 0 : i32
    %c0_i32_0 = arith.constant 0 : i32
    %c0_i32_1 = arith.constant 0 : i32
    return %c0_i32, %c0_i32_0 : i32, i32
  }
  func.func @transform_6(%arg0: i32) -> (i32, i32) {
    %c0_i32 = arith.constant 0 : i32
    %c0_i32_0 = arith.constant 0 : i32
    return %arg0, %c0_i32 : i32, i32
  }
  func.func @transform_7(%arg0: i32) -> (i32, i32) {
    %c0_i32 = arith.constant 0 : i32
    %c0_i32_0 = arith.constant 0 : i32
    return %arg0, %c0_i32 : i32, i32
  }
}

</mosaic_0001>

<llo_original>
// kernel: tpu_custom_call.1
$region0: #{tpu_custom_call.1}
  #allocation0 [shape = 'u32[]', space=smem, size = 0x4, offset = 0x4, fixed_abs, tag = 'smem constant byte address 0x4 - core index']
  #allocation1 [shape = 'u32[72,128]{1,0:T(1,128)}', space=vmem, size = 0x9000, scoped, tag = 'internal scratch']
  %s0 = inlined_call_operand.vmem [shape: f32[128,128], index: 0, kind: input, shape index: {}]
  %s1 = inlined_call_operand.vmem [shape: f32[128,8], index: 1, kind: input, shape index: {}]
  %s2 = inlined_call_operand.vmem [shape: f32[8,128], index: 2, kind: input, shape index: {}]
  %s3 = inlined_call_operand.vmem [shape: bf16[128,128], index: 3, kind: input, shape index: {}]
  %s4 = inlined_call_operand.vmem [shape: f32[1,128], index: 4, kind: input, shape index: {}]
  %s5 = inlined_call_operand.vmem [shape: f32[128,2], index: 5, kind: input, shape index: {}]
  %s6 = inlined_call_operand.hbm [shape: bf16[128,128], index: 6, kind: output, shape index: {0}]
  %s7 = inlined_call_operand.vmem [shape: f32[128,2], index: 7, kind: output, shape index: {1}]
  %8 = xla_tuple %s6, %s7
  %s9 = sld [smem:[#allocation0]]
  $region42: #{tpu_custom_call.1} parent=0
    _
  %s11 = ssub.s32 1, %s9
  %s12 = scalar_select 0, %s11, %s9
  $region1: #{tpu_custom_call.1} parent=0
    #allocation2 [shape = 'u8[32768]{0}', space=vmem, size = 0x8000, scoped, tag = 'output window, operand 0, single buffered']
    #allocation3 [shape = 's32[1]{0}', space=sflag, size = 0x4, scoped, tag = 'scoped memory for tpu_custom_call.1']
    %13 = vsyncpa [#allocation3], 0
    // Predicated region
    $region2: #{tpu_custom_call.1} parent=1 // pred_check
      _
    $region3: #{tpu_custom_call.1} parent=1 // pred_check_branch
      %15 = sbr.rel (0) target = $region5
    $region4: #{tpu_custom_call.1} parent=1 // pred_region
      _
    $region5: #{tpu_custom_call.1} parent=1 // pred_fallthru
      _
    // Predicated region
    $region6: #{tpu_custom_call.1} parent=1 // pred_check
      _
    $region7: #{tpu_custom_call.1} parent=1 // pred_check_branch
      %17 = sbr.rel (0) target = $region9
    $region8: #{tpu_custom_call.1} parent=1 // pred_region
      _
    $region9: #{tpu_custom_call.1} parent=1 // pred_fallthru
      _
    // Predicated region
    $region10: #{tpu_custom_call.1} parent=1 // pred_check
      _
    $region11: #{tpu_custom_call.1} parent=1 // pred_check_branch
      %19 = sbr.rel (0) target = $region13
    $region12: #{tpu_custom_call.1} parent=1 // pred_region
      _
    $region13: #{tpu_custom_call.1} parent=1 // pred_fallthru
      _
    // Predicated region
    $region14: #{tpu_custom_call.1} parent=1 // pred_check
      _
    $region15: #{tpu_custom_call.1} parent=1 // pred_check_branch
      %21 = sbr.rel (0) target = $region17
    $region16: #{tpu_custom_call.1} parent=1 // pred_region
      _
    $region17: #{tpu_custom_call.1} parent=1 // pred_fallthru
      _
    // Predicated region
    $region18: #{tpu_custom_call.1} parent=1 // pred_check
      _
    $region19: #{tpu_custom_call.1} parent=1 // pred_check_branch
      %23 = sbr.rel (0) target = $region21
    $region20: #{tpu_custom_call.1} parent=1 // pred_region
      _
    $region21: #{tpu_custom_call.1} parent=1 // pred_fallthru
      _
    // Predicated region
    $region22: #{tpu_custom_call.1} parent=1 // pred_check
      _
    $region23: #{tpu_custom_call.1} parent=1 // pred_check_branch
      %25 = sbr.rel (0) target = $region25
    $region24: #{tpu_custom_call.1} parent=1 // pred_region
      _
    $region25: #{tpu_custom_call.1} parent=1 // pred_fallthru
      _
    %v26 = vld [vmem:[%s0] sm:$0xff]
    %v27 = vld [vmem:[%s0 + $0x8] sm:$0xff]
    %v28 = vld [vmem:[%s0 + $0x10] sm:$0xff]
    %v29 = vld [vmem:[%s0 + $0x18] sm:$0xff]
    %v30 = vld [vmem:[%s0 + $0x20] sm:$0xff]
    %v31 = vld [vmem:[%s0 + $0x28] sm:$0xff]
    %v32 = vld [vmem:[%s0 + $0x30] sm:$0xff]
    %v33 = vld [vmem:[%s0 + $0x38] sm:$0xff]
    %v34 = vld [vmem:[%s0 + $0x40] sm:$0xff]
    %v35 = vld [vmem:[%s0 + $0x48] sm:$0xff]
    %v36 = vld [vmem:[%s0 + $0x50] sm:$0xff]
    %v37 = vld [vmem:[%s0 + $0x58] sm:$0xff]
    %v38 = vld [vmem:[%s0 + $0x60] sm:$0xff]
    %v39 = vld [vmem:[%s0 + $0x68] sm:$0xff]
    %v40 = vld [vmem:[%s0 + $0x70] sm:$0xff]
    %v41 = vld [vmem:[%s0 + $0x78] sm:$0xff]
    %v42 = vld [vmem:[%s1] sm:$0xff]
    %v43 = vld [vmem:[%s1 + $0x8] sm:$0xff]
    %v44 = vld [vmem:[%s1 + $0x10] sm:$0xff]
    %v45 = vld [vmem:[%s1 + $0x18] sm:$0xff]
    %v46 = vld [vmem:[%s1 + $0x20] sm:$0xff]
    %v47 = vld [vmem:[%s1 + $0x28] sm:$0xff]
    %v48 = vld [vmem:[%s1 + $0x30] sm:$0xff]
    %v49 = vld [vmem:[%s1 + $0x38] sm:$0xff]
    %v50 = vld [vmem:[%s1 + $0x40] sm:$0xff]
    %v51 = vld [vmem:[%s1 + $0x48] sm:$0xff]
    %v52 = vld [vmem:[%s1 + $0x50] sm:$0xff]
    %v53 = vld [vmem:[%s1 + $0x58] sm:$0xff]
    %v54 = vld [vmem:[%s1 + $0x60] sm:$0xff]
    %v55 = vld [vmem:[%s1 + $0x68] sm:$0xff]
    %v56 = vld [vmem:[%s1 + $0x70] sm:$0xff]
    %v57 = vld [vmem:[%s1 + $0x78] sm:$0xff]
    %v58 = vld [vmem:[%s2] sm:$0xff]
    %vm59 = vcmask 64512
    %v61 = vsel %vm59, %v42, 0
    %v64 = vsel %vm59, %v43, 0
    %v67 = vsel %vm59, %v44, 0
    %v70 = vsel %vm59, %v45, 0
    %v73 = vsel %vm59, %v46, 0
    %v76 = vsel %vm59, %v47, 0
    %v79 = vsel %vm59, %v48, 0
    %v82 = vsel %vm59, %v49, 0
    %v85 = vsel %vm59, %v50, 0
    %v88 = vsel %vm59, %v51, 0
    %v91 = vsel %vm59, %v52, 0
    %v94 = vsel %vm59, %v53, 0
    %v97 = vsel %vm59, %v54, 0
    %v100 = vsel %vm59, %v55, 0
    %v103 = vsel %vm59, %v56, 0
    %v106 = vsel %vm59, %v57, 0
    %108 = vmatpush.msra.mxu0 0.0
    %109 = vmatpush.msra.mxu0 0.0
    %110 = vmatpush.msra.mxu0 0.0
    %111 = vmatpush.msra.mxu0 0.0
    %112 = vmatpush.msra.mxu0 0.0
    %113 = vmatpush.msra.mxu0 0.0
    %114 = vmatpush.msra.mxu0 0.0
    %115 = vmatpush.msra.mxu0 0.0
    %116 = vmatpush.msra.mxu0 0.0
    %117 = vmatpush.msra.mxu0 0.0
    %118 = vmatpush.msra.mxu0 0.0
    %119 = vmatpush.msra.mxu0 0.0
    %120 = vmatpush.msra.mxu0 0.0
    %121 = vmatpush.msra.mxu0 0.0
    %122 = vmatpush.msra.mxu0 0.0
    %123 = vmatpush.msra.mxu0 %v58
    %124 = vmatmul.f32.gmra.mxu0 %v61
    %v125 = vpop.f32.mrf.mxu0
    %v126 = vadd.f32 0.0, %v125
    %127 = vmatmul.f32.gmra.mxu0 %v64
    %v128 = vpop.f32.mrf.mxu0
    %v129 = vadd.f32 0.0, %v128
    %130 = vmatmul.f32.gmra.mxu0 %v67
    %v131 = vpop.f32.mrf.mxu0
    %v132 = vadd.f32 0.0, %v131
    %133 = vmatmul.f32.gmra.mxu0 %v70
    %v134 = vpop.f32.mrf.mxu0
    %v135 = vadd.f32 0.0, %v134
    %136 = vmatmul.f32.gmra.mxu0 %v73
    %v137 = vpop.f32.mrf.mxu0
    %v138 = vadd.f32 0.0, %v137
    %139 = vmatmul.f32.gmra.mxu0 %v76
    %v140 = vpop.f32.mrf.mxu0
    %v141 = vadd.f32 0.0, %v140
    %142 = vmatmul.f32.gmra.mxu0 %v79
    %v143 = vpop.f32.mrf.mxu0
    %v144 = vadd.f32 0.0, %v143
    %145 = vmatmul.f32.gmra.mxu0 %v82
    %v146 = vpop.f32.mrf.mxu0
    %v147 = vadd.f32 0.0, %v146
    %148 = vmatmul.f32.gmra.mxu0 %v85
    %v149 = vpop.f32.mrf.mxu0
    %v150 = vadd.f32 0.0, %v149
    %151 = vmatmul.f32.gmra.mxu0 %v88
    %v152 = vpop.f32.mrf.mxu0
    %v153 = vadd.f32 0.0, %v152
    %154 = vmatmul.f32.gmra.mxu0 %v91
    %v155 = vpop.f32.mrf.mxu0
    %v156 = vadd.f32 0.0, %v155
    %157 = vmatmul.f32.gmra.mxu0 %v94
    %v158 = vpop.f32.mrf.mxu0
    %v159 = vadd.f32 0.0, %v158
    %160 = vmatmul.f32.gmra.mxu0 %v97
    %v161 = vpop.f32.mrf.mxu0
    %v162 = vadd.f32 0.0, %v161
    %163 = vmatmul.f32.gmra.mxu0 %v100
    %v164 = vpop.f32.mrf.mxu0
    %v165 = vadd.f32 0.0, %v164
    %166 = vmatmul.f32.gmra.mxu0 %v103
    %v167 = vpop.f32.mrf.mxu0
    %v168 = vadd.f32 0.0, %v167
    %169 = vmatmul.f32.gmra.mxu0 %v106
    %v170 = vpop.f32.mrf.mxu0
    %v171 = vadd.f32 0.0, %v170
    %172 = vdwg.mxu0
    %v173 = vadd.f32 %v26, %v126
    %v174 = vadd.f32 %v27, %v129
    %v175 = vadd.f32 %v28, %v132
    %v176 = vadd.f32 %v29, %v135
    %v177 = vadd.f32 %v30, %v138
    %v178 = vadd.f32 %v31, %v141
    %v179 = vadd.f32 %v32, %v144
    %v180 = vadd.f32 %v33, %v147
    %v181 = vadd.f32 %v34, %v150
    %v182 = vadd.f32 %v35, %v153
    %v183 = vadd.f32 %v36, %v156
    %v184 = vadd.f32 %v37, %v159
    %v185 = vadd.f32 %v38, %v162
    %v186 = vadd.f32 %v39, %v165
    %v187 = vadd.f32 %v40, %v168
    %v188 = vadd.f32 %v41, %v171
    %v189 = vpack.c.bf16 %v174, %v173
    %v190 = vpack.c.bf16 %v176, %v175
    %v191 = vpack.c.bf16 %v178, %v177
    %v192 = vpack.c.bf16 %v180, %v179
    %v193 = vpack.c.bf16 %v182, %v181
    %v194 = vpack.c.bf16 %v184, %v183
    %v195 = vpack.c.bf16 %v186, %v185
    %v196 = vpack.c.bf16 %v188, %v187
    %v197 = vld [vmem:[%s3] sm:$0xf]
    %v198 = vld [vmem:[%s3 + $0x4] sm:$0xf]
    %v199 = vld [vmem:[%s3 + $0x8] sm:$0xf]
    %v200 = vld [vmem:[%s3 + $0xc] sm:$0xf]
    %v201 = vld [vmem:[%s3 + $0x10] sm:$0xf]
    %v202 = vld [vmem:[%s3 + $0x14] sm:$0xf]
    %v203 = vld [vmem:[%s3 + $0x18] sm:$0xf]
    %v204 = vld [vmem:[%s3 + $0x1c] sm:$0xf]
    %v205 = vld [vmem:[%s3 + $0x20] sm:$0xf]
    %v206 = vld [vmem:[%s3 + $0x24] sm:$0xf]
    %v207 = vld [vmem:[%s3 + $0x28] sm:$0xf]
    %v208 = vld [vmem:[%s3 + $0x2c] sm:$0xf]
    %v209 = vld [vmem:[%s3 + $0x30] sm:$0xf]
    %v210 = vld [vmem:[%s3 + $0x34] sm:$0xf]
    %v211 = vld [vmem:[%s3 + $0x38] sm:$0xf]
    %v212 = vld [vmem:[%s3 + $0x3c] sm:$0xf]
    %v213 = vld [vmem:[%s4] sm:$0x1]
    %v215 = vperm.slane %v213, 0
    %v233 = vunpack.c.l.b16 %v197
    %v234 = vunpack.c.l.b16 %v198
    %v235 = vunpack.c.l.b16 %v199
    %v236 = vunpack.c.l.b16 %v200
    %v237 = vunpack.c.l.b16 %v201
    %v238 = vunpack.c.l.b16 %v202
    %v239 = vunpack.c.l.b16 %v203
    %v240 = vunpack.c.l.b16 %v204
    %v241 = vunpack.c.l.b16 %v205
    %v242 = vunpack.c.l.b16 %v206
    %v243 = vunpack.c.l.b16 %v207
    %v244 = vunpack.c.l.b16 %v208
    %v245 = vunpack.c.l.b16 %v209
    %v246 = vunpack.c.l.b16 %v210
    %v247 = vunpack.c.l.b16 %v211
    %v248 = vunpack.c.l.b16 %v212
    %v249 = vpack.c.b16 %v234, %v233
    %v250 = vpack.c.b16 %v236, %v235
    %v251 = vpack.c.b16 %v238, %v237
    %v252 = vpack.c.b16 %v240, %v239
    %v253 = vpack.c.b16 %v242, %v241
    %v254 = vpack.c.b16 %v244, %v243
    %v255 = vpack.c.b16 %v246, %v245
    %v256 = vpack.c.b16 %v248, %v247
    %265 = vmatpush.bf16.msra.mxu0 %v256
    %266 = vmatpush.bf16.msra.mxu0 %v255
    %267 = vmatpush.bf16.msra.mxu0 %v254
    %268 = vmatpush.bf16.msra.mxu0 %v253
    %269 = vmatpush.bf16.msra.mxu0 %v252
    %270 = vmatpush.bf16.msra.mxu0 %v251
    %271 = vmatpush.bf16.msra.mxu0 %v250
    %272 = vmatpush.bf16.msra.mxu0 %v249
    %273 = vmatmul.bf16.gmra.mxu0 %v189
    %v274 = vpop.f32.mrf.mxu0
    %v275 = vadd.f32 %v215, %v274
    %v276 = vpop.f32.mrf.mxu0
    %v277 = vadd.f32 %v215, %v276
    %278 = vmatmul.bf16.gmra.mxu0 %v190
    %v279 = vpop.f32.mrf.mxu0
    %v280 = vadd.f32 %v215, %v279
    %v281 = vpop.f32.mrf.mxu0
    %v282 = vadd.f32 %v215, %v281
    %283 = vmatmul.bf16.gmra.mxu0 %v191
    %v284 = vpop.f32.mrf.mxu0
    %v285 = vadd.f32 %v215, %v284
    %v286 = vpop.f32.mrf.mxu0
    %v287 = vadd.f32 %v215, %v286
    %288 = vmatmul.bf16.gmra.mxu0 %v192
    %v289 = vpop.f32.mrf.mxu0
    %v290 = vadd.f32 %v215, %v289
    %v291 = vpop.f32.mrf.mxu0
    %v292 = vadd.f32 %v215, %v291
    %293 = vmatmul.bf16.gmra.mxu0 %v193
    %v294 = vpop.f32.mrf.mxu0
    %v295 = vadd.f32 %v215, %v294
    %v296 = vpop.f32.mrf.mxu0
    %v297 = vadd.f32 %v215, %v296
    %298 = vmatmul.bf16.gmra.mxu0 %v194
    %v299 = vpop.f32.mrf.mxu0
    %v300 = vadd.f32 %v215, %v299
    %v301 = vpop.f32.mrf.mxu0
    %v302 = vadd.f32 %v215, %v301
    %303 = vmatmul.bf16.gmra.mxu0 %v195
    %v304 = vpop.f32.mrf.mxu0
    %v305 = vadd.f32 %v215, %v304
    %v306 = vpop.f32.mrf.mxu0
    %v307 = vadd.f32 %v215, %v306
    %308 = vmatmul.bf16.gmra.mxu0 %v196
    %v309 = vpop.f32.mrf.mxu0
    %v310 = vadd.f32 %v215, %v309
    %v311 = vpop.f32.mrf.mxu0
    %v312 = vadd.f32 %v215, %v311
    %313 = vdwg.mxu0
    %v314 = vpack.c.bf16 %v275, %v275
    %v315 = vpack.c.bf16 %v277, %v277
    %v316 = vpack.c.bf16 %v280, %v280
    %v317 = vpack.c.bf16 %v282, %v282
    %v318 = vpack.c.bf16 %v285, %v285
    %v319 = vpack.c.bf16 %v287, %v287
    %v320 = vpack.c.bf16 %v290, %v290
    %v321 = vpack.c.bf16 %v292, %v292
    %v322 = vpack.c.bf16 %v295, %v295
    %v323 = vpack.c.bf16 %v297, %v297
    %v324 = vpack.c.bf16 %v300, %v300
    %v325 = vpack.c.bf16 %v302, %v302
    %v326 = vpack.c.bf16 %v305, %v305
    %v327 = vpack.c.bf16 %v307, %v307
    %v328 = vpack.c.bf16 %v310, %v310
    %v329 = vpack.c.bf16 %v312, %v312
    %330 = vst [vmem:[#allocation2] sm:$0xf] %v314
    %331 = vst [vmem:[#allocation2 + $0x4] sm:$0xf] %v315
    %332 = vst [vmem:[#allocation2 + $0x8] sm:$0xf] %v316
    %333 = vst [vmem:[#allocation2 + $0xc] sm:$0xf] %v317
    %334 = vst [vmem:[#allocation2 + $0x10] sm:$0xf] %v318
    %335 = vst [vmem:[#allocation2 + $0x14] sm:$0xf] %v319
    %336 = vst [vmem:[#allocation2 + $0x18] sm:$0xf] %v320
    %337 = vst [vmem:[#allocation2 + $0x1c] sm:$0xf] %v321
    %338 = vst [vmem:[#allocation2 + $0x20] sm:$0xf] %v322
    %339 = vst [vmem:[#allocation2 + $0x24] sm:$0xf] %v323
    %340 = vst [vmem:[#allocation2 + $0x28] sm:$0xf] %v324
    %341 = vst [vmem:[#allocation2 + $0x2c] sm:$0xf] %v325
    %342 = vst [vmem:[#allocation2 + $0x30] sm:$0xf] %v326
    %343 = vst [vmem:[#allocation2 + $0x34] sm:$0xf] %v327
    %344 = vst [vmem:[#allocation2 + $0x38] sm:$0xf] %v328
    %345 = vst [vmem:[#allocation2 + $0x3c] sm:$0xf] %v329
    %v346 = vld [vmem:[%s5] sm:$0xff]
    %v347 = vld [vmem:[%s5 + $0x8] sm:$0xff]
    %v348 = vld [vmem:[%s5 + $0x10] sm:$0xff]
    %v349 = vld [vmem:[%s5 + $0x18] sm:$0xff]
    %v350 = vld [vmem:[%s5 + $0x20] sm:$0xff]
    %v351 = vld [vmem:[%s5 + $0x28] sm:$0xff]
    %v352 = vld [vmem:[%s5 + $0x30] sm:$0xff]
    %v353 = vld [vmem:[%s5 + $0x38] sm:$0xff]
    %v354 = vld [vmem:[%s5 + $0x40] sm:$0xff]
    %v355 = vld [vmem:[%s5 + $0x48] sm:$0xff]
    %v356 = vld [vmem:[%s5 + $0x50] sm:$0xff]
    %v357 = vld [vmem:[%s5 + $0x58] sm:$0xff]
    %v358 = vld [vmem:[%s5 + $0x60] sm:$0xff]
    %v359 = vld [vmem:[%s5 + $0x68] sm:$0xff]
    %v360 = vld [vmem:[%s5 + $0x70] sm:$0xff]
    %v361 = vld [vmem:[%s5 + $0x78] sm:$0xff]
    %362 = vmatpush.msra.mxu0 %v361
    %363 = vmatpush.msra.mxu0 %v360
    %364 = vmatpush.msra.mxu0 %v359
    %365 = vmatpush.msra.mxu0 %v358
    %366 = vmatpush.msra.mxu0 %v357
    %367 = vmatpush.msra.mxu0 %v356
    %368 = vmatpush.msra.mxu0 %v355
    %369 = vmatpush.msra.mxu0 %v354
    %370 = vmatpush.msra.mxu0 %v353
    %371 = vmatpush.msra.mxu0 %v352
    %372 = vmatpush.msra.mxu0 %v351
    %373 = vmatpush.msra.mxu0 %v350
    %374 = vmatpush.msra.mxu0 %v349
    %375 = vmatpush.msra.mxu0 %v348
    %376 = vmatpush.msra.mxu0 %v347
    %377 = vmatpush.msra.mxu0 %v346
    %378 = vmatmul.f32.gmra.mxu0 %v173
    %v379 = vpop.f32.mrf.mxu0
    %v380 = vadd.f32 0.0, %v379
    %381 = vmatmul.f32.gmra.mxu0 %v174
    %v382 = vpop.f32.mrf.mxu0
    %v383 = vadd.f32 0.0, %v382
    %384 = vmatmul.f32.gmra.mxu0 %v175
    %v385 = vpop.f32.mrf.mxu0
    %v386 = vadd.f32 0.0, %v385
    %387 = vmatmul.f32.gmra.mxu0 %v176
    %v388 = vpop.f32.mrf.mxu0
    %v389 = vadd.f32 0.0, %v388
    %390 = vmatmul.f32.gmra.mxu0 %v177
    %v391 = vpop.f32.mrf.mxu0
    %v392 = vadd.f32 0.0, %v391
    %393 = vmatmul.f32.gmra.mxu0 %v178
    %v394 = vpop.f32.mrf.mxu0
    %v395 = vadd.f32 0.0, %v394
    %396 = vmatmul.f32.gmra.mxu0 %v179
    %v397 = vpop.f32.mrf.mxu0
    %v398 = vadd.f32 0.0, %v397
    %399 = vmatmul.f32.gmra.mxu0 %v180
    %v400 = vpop.f32.mrf.mxu0
    %v401 = vadd.f32 0.0, %v400
    %402 = vmatmul.f32.gmra.mxu0 %v181
    %v403 = vpop.f32.mrf.mxu0
    %v404 = vadd.f32 0.0, %v403
    %405 = vmatmul.f32.gmra.mxu0 %v182
    %v406 = vpop.f32.mrf.mxu0
    %v407 = vadd.f32 0.0, %v406
    %408 = vmatmul.f32.gmra.mxu0 %v183
    %v409 = vpop.f32.mrf.mxu0
    %v410 = vadd.f32 0.0, %v409
    %411 = vmatmul.f32.gmra.mxu0 %v184
    %v412 = vpop.f32.mrf.mxu0
    %v413 = vadd.f32 0.0, %v412
    %414 = vmatmul.f32.gmra.mxu0 %v185
    %v415 = vpop.f32.mrf.mxu0
    %v416 = vadd.f32 0.0, %v415
    %417 = vmatmul.f32.gmra.mxu0 %v186
    %v418 = vpop.f32.mrf.mxu0
    %v419 = vadd.f32 0.0, %v418
    %420 = vmatmul.f32.gmra.mxu0 %v187
    %v421 = vpop.f32.mrf.mxu0
    %v422 = vadd.f32 0.0, %v421
    %423 = vmatmul.f32.gmra.mxu0 %v188
    %v424 = vpop.f32.mrf.mxu0
    %v425 = vadd.f32 0.0, %v424
    %426 = vdwg.mxu0
    %vm427 = vcmask 15360
    %428 = vst.msk [vmem:[%s7] sm:$0xff] %vm427, %v380
    %429 = vst.msk [vmem:[%s7 + $0x8] sm:$0xff] %vm427, %v383
    %430 = vst.msk [vmem:[%s7 + $0x10] sm:$0xff] %vm427, %v386
    %431 = vst.msk [vmem:[%s7 + $0x18] sm:$0xff] %vm427, %v389
    %432 = vst.msk [vmem:[%s7 + $0x20] sm:$0xff] %vm427, %v392
    %433 = vst.msk [vmem:[%s7 + $0x28] sm:$0xff] %vm427, %v395
    %434 = vst.msk [vmem:[%s7 + $0x30] sm:$0xff] %vm427, %v398
    %435 = vst.msk [vmem:[%s7 + $0x38] sm:$0xff] %vm427, %v401
    %436 = vst.msk [vmem:[%s7 + $0x40] sm:$0xff] %vm427, %v404
    %437 = vst.msk [vmem:[%s7 + $0x48] sm:$0xff] %vm427, %v407
    %438 = vst.msk [vmem:[%s7 + $0x50] sm:$0xff] %vm427, %v410
    %439 = vst.msk [vmem:[%s7 + $0x58] sm:$0xff] %vm427, %v413
    %440 = vst.msk [vmem:[%s7 + $0x60] sm:$0xff] %vm427, %v416
    %441 = vst.msk [vmem:[%s7 + $0x68] sm:$0xff] %vm427, %v419
    %442 = vst.msk [vmem:[%s7 + $0x70] sm:$0xff] %vm427, %v422
    %443 = vst.msk [vmem:[%s7 + $0x78] sm:$0xff] %vm427, %v425
    // Predicated region
    $region26: #{tpu_custom_call.1} parent=1 // pred_check
      _
    $region27: #{tpu_custom_call.1} parent=1 // pred_check_branch
      %445 = sbr.rel (0) target = $region29
    $region28: #{tpu_custom_call.1} parent=1 // pred_region
      %447 = vsyncadd [#allocation3], 0
      %s448 = sshll.u32 [#allocation2], 4
      %s449 = int_to_ptr.vmem [resolvable:$true] %s448
      %s450 = sshll.u32 %s6, 4
      %s451 = int_to_ptr.hbm [resolvable:$true] %s450
      %456 = dma.vmem_to_hbm [thread:$0]  %s449, 1024, %s451, [#allocation3], 64, 64, 4
    $region29: #{tpu_custom_call.1} parent=1 // pred_fallthru
      _
    // Predicated region
    $region30: #{tpu_custom_call.1} parent=1 // pred_check
      _
    $region31: #{tpu_custom_call.1} parent=1 // pred_check_branch
      %458 = sbr.rel (0) target = $region33
    $region32: #{tpu_custom_call.1} parent=1 // pred_region
      _
    $region33: #{tpu_custom_call.1} parent=1 // pred_fallthru
      _
    // Predicated region
    $region34: #{tpu_custom_call.1} parent=1 // pred_check
      _
    $region35: #{tpu_custom_call.1} parent=1 // pred_check_branch
      %460 = sbr.rel (0) target = $region37
    $region36: #{tpu_custom_call.1} parent=1 // pred_region
      %462 = dma.done [#allocation3], 1024
    $region37: #{tpu_custom_call.1} parent=1 // pred_fallthru
      _
    // Predicated region
    $region38: #{tpu_custom_call.1} parent=1 // pred_check
      _
    $region39: #{tpu_custom_call.1} parent=1 // pred_check_branch
      %464 = sbr.rel (0) target = $region41
    $region40: #{tpu_custom_call.1} parent=1 // pred_region
      _
    $region41: #{tpu_custom_call.1} parent=1 // pred_fallthru
      _
    %465 = vsyncpa [#allocation3], 1

</llo_original>
